<compile_context>
chip_gen: v7x
topology: tpu7x:2x2x1
jax: 0.10.0
libtpu: 0.0.40
codegen_flags: <defaults>
</compile_context>

<pallas_src>
import functools

import jax
import jax.numpy as jnp
from jax import lax
from jax.experimental import pallas as pl
from jax.experimental.pallas import tpu as pltpu


# --------------------------------------------------------------------------
# Kernel
# --------------------------------------------------------------------------
def _se_basic_block_kernel(x_ref, wm1_ref, wm2_ref,
                           s1_ref, b1_ref, s2_ref, b2_ref,
                           o_ref, *, compute_dtype):
    """One batch element per grid step; everything lane-dense (H, W*C).

    x_ref  : (1, H, W*Cin)  f32   lane-dense input (also the residual)
    wm*_ref: (3, W*Ci, W*Co)      banded conv weights, one matrix per dy
    s*,b*  : (1, W*Cout)    f32   folded BN scale / bias, tiled over x
    o_ref  : (1, H, W*Cout)       lane-dense output block
    """
    x = x_ref[0]                                   # (H, W*Cin), float32

    def conv3x3(a, wm_ref):
        """3x3 conv of a lane-dense f32 activation (H, W*Ci) -> (H, W*Co) f32.

        The dx taps and the W-edge zero padding are folded into the banded
        weight matrices; the dy halo is handled with two sublane shifts
        (concatenate one zero row) on a tiny 2-vreg value.
        """
        zero = jnp.zeros((1, a.shape[1]), jnp.float32)
        rows = (jnp.concatenate([zero, a[:-1]], axis=0),   # row y -> a[y-1] (dy=0)
                a,                                         # row y -> a[y]   (dy=1)
                jnp.concatenate([a[1:], zero], axis=0))    # row y -> a[y+1] (dy=2)
        acc = jnp.dot(rows[0].astype(compute_dtype), wm_ref[0],
                      preferred_element_type=jnp.float32)
        for dy in (1, 2):
            acc = acc + jnp.dot(rows[dy].astype(compute_dtype), wm_ref[dy],
                                preferred_element_type=jnp.float32)
        return acc                                  # (H, W*Co) float32

    # conv1 -> relu -> bn1   (same op order as the PyTorch forward)
    out1 = conv3x3(x, wm1_ref)
    out1 = jnp.maximum(out1, 0.0) * s1_ref[...] + b1_ref[...]

    # conv2 -> bn2
    out2 = conv3x3(out1, wm2_ref) * s2_ref[...] + b2_ref[...]

    # identity residual + final relu; lane-dense unmasked store
    o_ref[0] = jnp.maximum(out2 + x, 0.0).astype(o_ref.dtype)


# --------------------------------------------------------------------------
# Wrapper helpers
# --------------------------------------------------------------------------
def _band_weights(w_oihw, W):
    """OIHW (Co,Ci,3,3) -> (3, W*Ci, W*Co) banded matrices, one per dy.

    WM[dy][x'*Ci + ci, x*Co + co] = w[dy, x'-x+1, ci, co]  if |x'-x| <= 1 else 0

    so  (H, W*Ci) @ WM[dy]  realizes all three dx taps of kernel-row dy,
    including the zero padding at the W edges.
    """
    w = jnp.transpose(w_oihw, (2, 3, 1, 0))            # HWIO: (3, 3, Ci, Co)
    Kh, Kw, Ci, Co = w.shape
    xs = jnp.arange(W)
    dx = xs[:, None] - xs[None, :] + 1                 # (W', W): x' - x + 1
    valid = ((dx >= 0) & (dx < Kw)).astype(w.dtype)
    blk = w[:, jnp.clip(dx, 0, Kw - 1), :, :]          # (3, W', W, Ci, Co)
    blk = blk * valid[None, :, :, None, None]
    blk = jnp.transpose(blk, (0, 1, 3, 2, 4))          # (3, W', Ci, W, Co)
    return blk.reshape(Kh, W * Ci, W * Co)


def _fold_bn(gamma, beta, mean, var, eps):
    scale = gamma / jnp.sqrt(var + eps)
    bias = beta - mean * scale
    return scale, bias


# --------------------------------------------------------------------------
# Public entry point
# --------------------------------------------------------------------------
def se_basic_block(x_nchw, w1_oihw, w2_oihw, bn1_params, bn2_params,
                   eps=1e-5, compute_dtype=jnp.bfloat16):
    """Pallas SEBasicBlock.forward (stride=1, downsample=None, inference BN)."""
    B, Cin, H, W = x_nchw.shape
    Cout = w1_oihw.shape[0]
    assert Cin == Cout, "identity residual requires inplanes == planes"
    WC = W * Cout  # lane width; 128 for the demo shape -> fully lane-dense

    # NCHW -> lane-dense (B, H, W*C); kept f32 so the residual add is exact.
    x2d = jnp.transpose(x_nchw, (0, 2, 3, 1)).reshape(B, H, W * Cin)
    x2d = x2d.astype(jnp.float32)

    # Banded conv weights (MXU operands) in the compute dtype.
    wm1 = _band_weights(w1_oihw, W).astype(compute_dtype)   # (3, W*Cin,  W*Cout)
    wm2 = _band_weights(w2_oihw, W).astype(compute_dtype)   # (3, W*Cout, W*Cout)

    # Fold inference-mode BN into per-channel scale/bias, tiled onto (x, c) lanes.
    s1, b1 = _fold_bn(*bn1_params, eps)
    s2, b2 = _fold_bn(*bn2_params, eps)
    tile = lambda v: jnp.tile(v.astype(jnp.float32), W).reshape(1, WC)
    s1, b1, s2, b2 = tile(s1), tile(b1), tile(s2), tile(b2)

    kernel = functools.partial(_se_basic_block_kernel, compute_dtype=compute_dtype)

    w_itemsize = jnp.dtype(compute_dtype).itemsize
    cost = pl.CostEstimate(
        flops=2 * B * 2 * 3 * H * WC * WC,               # 2 convs x 3 dots
        transcendentals=0,
        bytes_accessed=(2 * B * H * WC * 4               # x in + out
                        + 3 * W * Cin * WC * w_itemsize  # wm1
                        + 3 * WC * WC * w_itemsize       # wm2
                        + 4 * WC * 4))                   # BN scale/bias

    out2d = pl.pallas_call(
        kernel,
        out_shape=jax.ShapeDtypeStruct((B, H, WC), jnp.float32),
        grid_spec=pltpu.PrefetchScalarGridSpec(
            num_scalar_prefetch=0,
            grid=(B,),
            in_specs=[
                pl.BlockSpec((1, H, WC), lambda b: (b, 0, 0)),          # x (res)
                pl.BlockSpec((3, W * Cin, WC), lambda b: (0, 0, 0)),    # wm1
                pl.BlockSpec((3, WC, WC), lambda b: (0, 0, 0)),         # wm2
                pl.BlockSpec((1, WC), lambda b: (0, 0)),                # s1
                pl.BlockSpec((1, WC), lambda b: (0, 0)),                # b1
                pl.BlockSpec((1, WC), lambda b: (0, 0)),                # s2
                pl.BlockSpec((1, WC), lambda b: (0, 0)),                # b2
            ],
            out_specs=pl.BlockSpec((1, H, WC), lambda b: (b, 0, 0)),
        ),
        compiler_params=pltpu.CompilerParams(
            dimension_semantics=("parallel",)),   # batch shards across v7x cores
        cost_estimate=cost,
    )(x2d, wm1, wm2, s1, b1, s2, b2)

    # lane-dense (B, H, W*C) -> NCHW
    return jnp.transpose(out2d.reshape(B, H, W, Cout), (0, 3, 1, 2))


# --------------------------------------------------------------------------
# Pure-JAX reference of the PyTorch forward (inference-mode BN)
# --------------------------------------------------------------------------
def reference_nchw(x, w1, w2, bn1_params, bn2_params, eps=1e-5):
    dn = ('NCHW', 'OIHW', 'NCHW')

    def bn(t, params):
        g, b, m, v = params
        return (t - m[None, :, None, None]) / jnp.sqrt(v + eps)[None, :, None, None] \
               * g[None, :, None, None] + b[None, :, None, None]

    out = lax.conv_general_dilated(x, w1, (1, 1), ((1, 1), (1, 1)),
                                   dimension_numbers=dn,
                                   precision=lax.Precision.HIGHEST)
    out = jnp.maximum(out, 0.0)
    out = bn(out, bn1_params)
    out = lax.conv_general_dilated(out, w2, (1, 1), ((1, 1), (1, 1)),
                                   dimension_numbers=dn,
                                   precision=lax.Precision.HIGHEST)
    out = bn(out, bn2_params)
    out = out + x
    return jnp.maximum(out, 0.0)


if __name__ == "__main__":
    B, C, H, W = 2, 8, 16, 16   # inplanes = planes = 8, stride=1, downsample=None
    key = jax.random.PRNGKey(0)
    kx, kw1, kw2, kg1, kb1, km1, kv1, kg2, kb2, km2, kv2 = jax.random.split(key, 11)

    x = jax.random.normal(kx, (B, C, H, W), dtype=jnp.float32)

    # Conv weights (OIHW, no bias), kaiming-ish scale.
    fan_in = C * 3 * 3
    w1 = jax.random.normal(kw1, (C, C, 3, 3), dtype=jnp.float32) * (2.0 / fan_in) ** 0.5
    w2 = jax.random.normal(kw2, (C, C, 3, 3), dtype=jnp.float32) * (2.0 / fan_in) ** 0.5

    # BatchNorm params: (gamma, beta, running_mean, running_var) — inference mode.
    bn1_params = (jax.random.uniform(kg1, (C,), minval=0.5, maxval=1.5),
                  0.1 * jax.random.normal(kb1, (C,)),
                  0.1 * jax.random.normal(km1, (C,)),
                  jax.random.uniform(kv1, (C,), minval=0.5, maxval=1.5))
    bn2_params = (jax.random.uniform(kg2, (C,), minval=0.5, maxval=1.5),
                  0.1 * jax.random.normal(kb2, (C,)),
                  0.1 * jax.random.normal(km2, (C,)),
                  jax.random.uniform(kv2, (C,), minval=0.5, maxval=1.5))

    ref = reference_nchw(x, w1, w2, bn1_params, bn2_params)

    # f32 MXU operands: tight numerical check.
    out_f32 = se_basic_block(x, w1, w2, bn1_params, bn2_params,
                             compute_dtype=jnp.float32)
    out_f32 = jax.block_until_ready(out_f32)
    assert out_f32.shape == (B, C, H, W)
    assert jnp.allclose(out_f32, ref, rtol=2e-3, atol=2e-3), \
        f"f32 path: max abs err {jnp.max(jnp.abs(out_f32 - ref))}"

    # bf16 MXU operands (fast path for v6e/v7x); accumulation + elementwise stay
    # f32, so only operand rounding differs -> looser tolerance.
    out_bf16 = se_basic_block(x, w1, w2, bn1_params, bn2_params,
                              compute_dtype=jnp.bfloat16)
    out_bf16 = jax.block_until_ready(out_bf16)
    assert out_bf16.shape == (B, C, H, W)
    assert jnp.allclose(out_bf16, ref, rtol=5e-2, atol=5e-2), \
        f"bf16 path: max abs err {jnp.max(jnp.abs(out_bf16 - ref))}"

    print("KERNEL_OK")
</pallas_src>

<mosaic_0001>
module attributes {stable_mosaic.version = 11 : i64} {
  func.func @_se_basic_block_kernel(%arg0: i32, %arg1: memref<1x16x128xf32, #tpu.memory_space<vmem>>, %arg2: memref<3x128x128xf32, #tpu.memory_space<vmem>>, %arg3: memref<3x128x128xf32, #tpu.memory_space<vmem>>, %arg4: memref<1x128xf32, #tpu.memory_space<vmem>>, %arg5: memref<1x128xf32, #tpu.memory_space<vmem>>, %arg6: memref<1x128xf32, #tpu.memory_space<vmem>>, %arg7: memref<1x128xf32, #tpu.memory_space<vmem>>, %arg8: memref<1x16x128xf32, #tpu.memory_space<vmem>>) attributes {dimension_semantics = [#tpu.dimension_semantics<parallel>], iteration_bounds = array<i64: 2>, scalar_prefetch = 0 : i64, scratch_operands = 0 : i64, tpu.core_type = #tpu.core_type<tc>, window_params = [{transform_indices = @transform_0, window_bounds = array<i64: 1, 16, 128>}, {pipeline_mode = #tpu.pipeline_mode<synchronous>, transform_indices = @transform_1, window_bounds = array<i64: 3, 128, 128>}, {pipeline_mode = #tpu.pipeline_mode<synchronous>, transform_indices = @transform_2, window_bounds = array<i64: 3, 128, 128>}, {pipeline_mode = #tpu.pipeline_mode<synchronous>, transform_indices = @transform_3, window_bounds = array<i64: 1, 128>}, {pipeline_mode = #tpu.pipeline_mode<synchronous>, transform_indices = @transform_4, window_bounds = array<i64: 1, 128>}, {pipeline_mode = #tpu.pipeline_mode<synchronous>, transform_indices = @transform_5, window_bounds = array<i64: 1, 128>}, {pipeline_mode = #tpu.pipeline_mode<synchronous>, transform_indices = @transform_6, window_bounds = array<i64: 1, 128>}, {transform_indices = @transform_7, window_bounds = array<i64: 1, 16, 128>}]} {
    %c0 = arith.constant 0 : index
    %c0_0 = arith.constant 0 : index
    %c0_1 = arith.constant 0 : index
    %0 = vector.load %arg1[%c0, %c0_0, %c0_1] : memref<1x16x128xf32, #tpu.memory_space<vmem>>, vector<1x16x128xf32>
    %1 = vector.shape_cast %0 : vector<1x16x128xf32> to vector<16x128xf32>
    %cst = arith.constant 0.000000e+00 : f32
    %2 = vector.broadcast %cst : f32 to vector<1x128xf32>
    %3 = vector.extract_strided_slice %1 {offsets = [0, 0], sizes = [15, 128], strides = [1, 1]} : vector<16x128xf32> to vector<15x128xf32>
    %4 = tpu.concatenate %2, %3 in 0 : vector<1x128xf32>, vector<15x128xf32> -> vector<16x128xf32>
    %5 = vector.extract_strided_slice %1 {offsets = [1, 0], sizes = [15, 128], strides = [1, 1]} : vector<16x128xf32> to vector<15x128xf32>
    %6 = tpu.concatenate %5, %2 in 0 : vector<15x128xf32>, vector<1x128xf32> -> vector<16x128xf32>
    %c0_2 = arith.constant 0 : index
    %c0_3 = arith.constant 0 : index
    %c0_4 = arith.constant 0 : index
    %7 = vector.load %arg2[%c0_2, %c0_3, %c0_4] : memref<3x128x128xf32, #tpu.memory_space<vmem>>, vector<1x128x128xf32>
    %8 = vector.shape_cast %7 : vector<1x128x128xf32> to vector<128x128xf32>
    %cst_5 = arith.constant dense<0.000000e+00> : vector<16x128xf32>
    %9 = tpu.matmul %4, %8, %cst_5 {dimension_numbers = #tpu.dot_dimension_numbers<[1], [0], [0], [1], [0, 0, 1, 1], [], []>} : vector<16x128xf32>, vector<128x128xf32>, vector<16x128xf32> -> vector<16x128xf32>
    %c1 = arith.constant 1 : index
    %c0_6 = arith.constant 0 : index
    %c0_7 = arith.constant 0 : index
    %10 = vector.load %arg2[%c1, %c0_6, %c0_7] : memref<3x128x128xf32, #tpu.memory_space<vmem>>, vector<1x128x128xf32>
    %11 = vector.shape_cast %10 : vector<1x128x128xf32> to vector<128x128xf32>
    %cst_8 = arith.constant dense<0.000000e+00> : vector<16x128xf32>
    %12 = tpu.matmul %1, %11, %cst_8 {dimension_numbers = #tpu.dot_dimension_numbers<[1], [0], [0], [1], [0, 0, 1, 1], [], []>} : vector<16x128xf32>, vector<128x128xf32>, vector<16x128xf32> -> vector<16x128xf32>
    %13 = arith.addf %9, %12 : vector<16x128xf32>
    %c2 = arith.constant 2 : index
    %c0_9 = arith.constant 0 : index
    %c0_10 = arith.constant 0 : index
    %14 = vector.load %arg2[%c2, %c0_9, %c0_10] : memref<3x128x128xf32, #tpu.memory_space<vmem>>, vector<1x128x128xf32>
    %15 = vector.shape_cast %14 : vector<1x128x128xf32> to vector<128x128xf32>
    %cst_11 = arith.constant dense<0.000000e+00> : vector<16x128xf32>
    %16 = tpu.matmul %6, %15, %cst_11 {dimension_numbers = #tpu.dot_dimension_numbers<[1], [0], [0], [1], [0, 0, 1, 1], [], []>} : vector<16x128xf32>, vector<128x128xf32>, vector<16x128xf32> -> vector<16x128xf32>
    %17 = arith.addf %13, %16 : vector<16x128xf32>
    %cst_12 = arith.constant 0.000000e+00 : f32
    %18 = vector.broadcast %cst_12 : f32 to vector<16x128xf32>
    %19 = arith.maximumf %17, %18 : vector<16x128xf32>
    %c0_13 = arith.constant 0 : index
    %c0_14 = arith.constant 0 : index
    %20 = vector.load %arg4[%c0_13, %c0_14] : memref<1x128xf32, #tpu.memory_space<vmem>>, vector<1x128xf32>
    %21 = vector.broadcast %20 : vector<1x128xf32> to vector<16x128xf32>
    %22 = arith.mulf %19, %21 : vector<16x128xf32>
    %c0_15 = arith.constant 0 : index
    %c0_16 = arith.constant 0 : index
    %23 = vector.load %arg5[%c0_15, %c0_16] : memref<1x128xf32, #tpu.memory_space<vmem>>, vector<1x128xf32>
    %24 = vector.broadcast %23 : vector<1x128xf32> to vector<16x128xf32>
    %25 = arith.addf %22, %24 : vector<16x128xf32>
    %cst_17 = arith.constant 0.000000e+00 : f32
    %26 = vector.broadcast %cst_17 : f32 to vector<1x128xf32>
    %27 = vector.extract_strided_slice %25 {offsets = [0, 0], sizes = [15, 128], strides = [1, 1]} : vector<16x128xf32> to vector<15x128xf32>
    %28 = tpu.concatenate %26, %27 in 0 : vector<1x128xf32>, vector<15x128xf32> -> vector<16x128xf32>
    %29 = vector.extract_strided_slice %25 {offsets = [1, 0], sizes = [15, 128], strides = [1, 1]} : vector<16x128xf32> to vector<15x128xf32>
    %30 = tpu.concatenate %29, %26 in 0 : vector<15x128xf32>, vector<1x128xf32> -> vector<16x128xf32>
    %c0_18 = arith.constant 0 : index
    %c0_19 = arith.constant 0 : index
    %c0_20 = arith.constant 0 : index
    %31 = vector.load %arg3[%c0_18, %c0_19, %c0_20] : memref<3x128x128xf32, #tpu.memory_space<vmem>>, vector<1x128x128xf32>
    %32 = vector.shape_cast %31 : vector<1x128x128xf32> to vector<128x128xf32>
    %cst_21 = arith.constant dense<0.000000e+00> : vector<16x128xf32>
    %33 = tpu.matmul %28, %32, %cst_21 {dimension_numbers = #tpu.dot_dimension_numbers<[1], [0], [0], [1], [0, 0, 1, 1], [], []>} : vector<16x128xf32>, vector<128x128xf32>, vector<16x128xf32> -> vector<16x128xf32>
    %c1_22 = arith.constant 1 : index
    %c0_23 = arith.constant 0 : index
    %c0_24 = arith.constant 0 : index
    %34 = vector.load %arg3[%c1_22, %c0_23, %c0_24] : memref<3x128x128xf32, #tpu.memory_space<vmem>>, vector<1x128x128xf32>
    %35 = vector.shape_cast %34 : vector<1x128x128xf32> to vector<128x128xf32>
    %cst_25 = arith.constant dense<0.000000e+00> : vector<16x128xf32>
    %36 = tpu.matmul %25, %35, %cst_25 {dimension_numbers = #tpu.dot_dimension_numbers<[1], [0], [0], [1], [0, 0, 1, 1], [], []>} : vector<16x128xf32>, vector<128x128xf32>, vector<16x128xf32> -> vector<16x128xf32>
    %37 = arith.addf %33, %36 : vector<16x128xf32>
    %c2_26 = arith.constant 2 : index
    %c0_27 = arith.constant 0 : index
    %c0_28 = arith.constant 0 : index
    %38 = vector.load %arg3[%c2_26, %c0_27, %c0_28] : memref<3x128x128xf32, #tpu.memory_space<vmem>>, vector<1x128x128xf32>
    %39 = vector.shape_cast %38 : vector<1x128x128xf32> to vector<128x128xf32>
    %cst_29 = arith.constant dense<0.000000e+00> : vector<16x128xf32>
    %40 = tpu.matmul %30, %39, %cst_29 {dimension_numbers = #tpu.dot_dimension_numbers<[1], [0], [0], [1], [0, 0, 1, 1], [], []>} : vector<16x128xf32>, vector<128x128xf32>, vector<16x128xf32> -> vector<16x128xf32>
    %41 = arith.addf %37, %40 : vector<16x128xf32>
    %c0_30 = arith.constant 0 : index
    %c0_31 = arith.constant 0 : index
    %42 = vector.load %arg6[%c0_30, %c0_31] : memref<1x128xf32, #tpu.memory_space<vmem>>, vector<1x128xf32>
    %43 = vector.broadcast %42 : vector<1x128xf32> to vector<16x128xf32>
    %44 = arith.mulf %41, %43 : vector<16x128xf32>
    %c0_32 = arith.constant 0 : index
    %c0_33 = arith.constant 0 : index
    %45 = vector.load %arg7[%c0_32, %c0_33] : memref<1x128xf32, #tpu.memory_space<vmem>>, vector<1x128xf32>
    %46 = vector.broadcast %45 : vector<1x128xf32> to vector<16x128xf32>
    %47 = arith.addf %44, %46 : vector<16x128xf32>
    %48 = arith.addf %47, %1 : vector<16x128xf32>
    %cst_34 = arith.constant 0.000000e+00 : f32
    %49 = vector.broadcast %cst_34 : f32 to vector<16x128xf32>
    %50 = arith.maximumf %48, %49 : vector<16x128xf32>
    %c0_35 = arith.constant 0 : index
    %c0_36 = arith.constant 0 : index
    %c0_37 = arith.constant 0 : index
    %51 = vector.load %arg8[%c0_35, %c0_36, %c0_37] : memref<1x16x128xf32, #tpu.memory_space<vmem>>, vector<1x16x128xf32>
    %52 = vector.shape_cast %51 : vector<1x16x128xf32> to vector<16x128xf32>
    %53 = vector.shape_cast %50 : vector<16x128xf32> to vector<1x16x128xf32>
    tpu.vector_store %arg8[%c0_35, %c0_36, %c0_37], %53 {strides = array<i32>} : memref<1x16x128xf32, #tpu.memory_space<vmem>>, vector<1x16x128xf32>,
    return
  }
  func.func @transform_0(%arg0: i32) -> (i32, i32, i32) {
    %c0_i32 = arith.constant 0 : i32
    %c0_i32_0 = arith.constant 0 : i32
    %c0_i32_1 = arith.constant 0 : i32
    return %arg0, %c0_i32, %c0_i32_0 : i32, i32, i32
  }
  func.func @transform_1(%arg0: i32) -> (i32, i32, i32) {
    %c0_i32 = arith.constant 0 : i32
    %c0_i32_0 = arith.constant 0 : i32
    %c0_i32_1 = arith.constant 0 : i32
    %c0_i32_2 = arith.constant 0 : i32
    return %c0_i32, %c0_i32_0, %c0_i32_1 : i32, i32, i32
  }
  func.func @transform_2(%arg0: i32) -> (i32, i32, i32) {
    %c0_i32 = arith.constant 0 : i32
    %c0_i32_0 = arith.constant 0 : i32
    %c0_i32_1 = arith.constant 0 : i32
    %c0_i32_2 = arith.constant 0 : i32
    return %c0_i32, %c0_i32_0, %c0_i32_1 : i32, i32, i32
  }
  func.func @transform_3(%arg0: i32) -> (i32, i32) {
    %c0_i32 = arith.constant 0 : i32
    %c0_i32_0 = arith.constant 0 : i32
    %c0_i32_1 = arith.constant 0 : i32
    return %c0_i32, %c0_i32_0 : i32, i32
  }
  func.func @transform_4(%arg0: i32) -> (i32, i32) {
    %c0_i32 = arith.constant 0 : i32
    %c0_i32_0 = arith.constant 0 : i32
    %c0_i32_1 = arith.constant 0 : i32
    return %c0_i32, %c0_i32_0 : i32, i32
  }
  func.func @transform_5(%arg0: i32) -> (i32, i32) {
    %c0_i32 = arith.constant 0 : i32
    %c0_i32_0 = arith.constant 0 : i32
    %c0_i32_1 = arith.constant 0 : i32
    return %c0_i32, %c0_i32_0 : i32, i32
  }
  func.func @transform_6(%arg0: i32) -> (i32, i32) {
    %c0_i32 = arith.constant 0 : i32
    %c0_i32_0 = arith.constant 0 : i32
    %c0_i32_1 = arith.constant 0 : i32
    return %c0_i32, %c0_i32_0 : i32, i32
  }
  func.func @transform_7(%arg0: i32) -> (i32, i32, i32) {
    %c0_i32 = arith.constant 0 : i32
    %c0_i32_0 = arith.constant 0 : i32
    %c0_i32_1 = arith.constant 0 : i32
    return %arg0, %c0_i32, %c0_i32_0 : i32, i32, i32
  }
}

</mosaic_0001>

<llo_original>
// kernel: tpu_custom_call.1
$region0: #{tpu_custom_call.1}
  #allocation0 [shape = 'u32[]', space=smem, size = 0x4, offset = 0x4, fixed_abs, tag = 'smem constant byte address 0x4 - core index']
  #allocation1 [shape = 'u32[144,128]{1,0:T(1,128)}', space=vmem, size = 0x12000, scoped, tag = 'internal scratch']
  %s0 = inlined_call_operand.hbm [shape: f32[2,16,128], index: 0, kind: input, shape index: {}]
  %s1 = inlined_call_operand.hbm [shape: f32[3,128,128], index: 1, kind: input, shape index: {}]
  %s2 = inlined_call_operand.hbm [shape: f32[3,128,128], index: 2, kind: input, shape index: {}]
  %s3 = inlined_call_operand.vmem [shape: f32[1,128], index: 3, kind: input, shape index: {}]
  %s4 = inlined_call_operand.vmem [shape: f32[1,128], index: 4, kind: input, shape index: {}]
  %s5 = inlined_call_operand.vmem [shape: f32[1,128], index: 5, kind: input, shape index: {}]
  %s6 = inlined_call_operand.vmem [shape: f32[1,128], index: 6, kind: input, shape index: {}]
  %s7 = inlined_call_operand.hbm [shape: f32[2,16,128], index: 7, kind: output, shape index: {}]
  %s8 = sld [smem:[#allocation0]]
  $region73: #{tpu_custom_call.1} parent=0
    _
  %s10 = ssub.s32 1, %s8
  %s11 = scalar_select 0, %s10, %s8
  $region1: #{tpu_custom_call.1} parent=0
    #allocation2 [shape = 'u8[16384]{0}', space=vmem, size = 0x4000, scoped, tag = 'input window, operand 0']
    #allocation3 [shape = 's32[2]{0}', space=sflag, size = 0x8, scoped, tag = 'scoped memory for tpu_custom_call.1']
    #allocation4 [shape = 's32[2]{0}', space=sflag, size = 0x8, scoped, tag = 'scoped memory for tpu_custom_call.1']
    #allocation5 [shape = 'u8[196608]{0}', space=vmem, size = 0x30000, scoped, tag = 'input window, operand 1, single buffered']
    #allocation6 [shape = 's32[1]{0}', space=sflag, size = 0x4, scoped, tag = 'scoped memory for tpu_custom_call.1']
    #allocation7 [shape = 'u8[196608]{0}', space=vmem, size = 0x30000, scoped, tag = 'input window, operand 2, single buffered']
    #allocation8 [shape = 'u8[16384]{0}', space=vmem, size = 0x4000, scoped, tag = 'output window, operand 0']
    %12 = vsyncpa [#allocation3], 0
    %s13 = scalar_lea.sflag [#allocation3], 1
    %14 = vsyncpa %s13, 0
    %15 = vsyncpa [#allocation6], 0
    %16 = vsyncpa [#allocation4], 0
    %s17 = scalar_lea.sflag [#allocation4], 1
    %18 = vsyncpa %s17, 0
    loop: start=0, step=1, limit=4
    $region2: #{tpu_custom_call.1} parent=1 // loop_pre_header
      _
    $region3: #{tpu_custom_call.1} parent=1 // loop_header
      %s20 = sphi 0, %s24
      %p21 = scmp.ge.s32.totalorder %s20, 4
      %s30 = sphi 0, %s32
      %s33 = sphi 0, %s30
      %s34 = sphi 0, %s33
      %s50 = sphi 0, %s34
      %s54 = sphi 0, %s54
      %s56 = sphi 0, %s54
      %s57 = sphi 0, %s56
      %s71 = sphi 0, %s57
      %s75 = sphi 0, %s75
      %s77 = sphi 0, %s75
      %s78 = sphi 0, %s77
      %s92 = sphi 0, %s78
      %s96 = sphi 0, %s96
      %s98 = sphi 0, %s96
      %s99 = sphi 0, %s98
      %s113 = sphi 0, %s99
      %s117 = sphi 0, %s117
      %s119 = sphi 0, %s117
      %s120 = sphi 0, %s119
      %s134 = sphi 0, %s120
      %s138 = sphi 0, %s138
      %s140 = sphi 0, %s138
      %s141 = sphi 0, %s140
      %s155 = sphi 0, %s141
      %s159 = sphi 0, %s159
      %s161 = sphi 0, %s159
      %s162 = sphi 0, %s161
      %s176 = sphi 0, %s162
      %s182 = sphi 0, %s184
      %s185 = sphi 0, %s182
      %s186 = sphi 0, %s185
      %s202 = sphi 0, %s186
    $region4: #{tpu_custom_call.1} parent=1 // loop_header_branch
      %23 = sbr.rel (%p21) target = $region8
    $region5: #{tpu_custom_call.1} parent=1 // loop_body
      %s25 = ssub.s32 %s20, 1
      %s26 = ssub.s32 %s20, 2
      %s27 = sadd.s32 %s20, 1
      %s28 = ssub.s32 %s20, %s27
      %p29 = scmp.eq.s32.totalorder %s28, 0
      %s31 = sadd.s32 %s30, 1
      %s32 = scalar_select %p29, %s30, %s31
      %p35 = pneg %p29
      %p36 = scmp.eq.s32.totalorder %s20, 1
      %p37 = por %p35, %p36
      %p38 = scmp.ne.s32.totalorder %s30, %s33
      %p39 = scmp.eq.s32.totalorder %s20, 0
      %p40 = por %p38, %p39
      %p41 = scmp.ne.s32.totalorder %s30, %s33
      %p42 = scmp.eq.s32.totalorder %s25, 1
      %p43 = por %p41, %p42
      %p44 = scmp.ne.s32.totalorder %s33, %s34
      %p45 = scmp.eq.s32.totalorder %s25, 0
      %p46 = por %p44, %p45
      %p47 = scmp.ne.s32.totalorder %s33, %s34
      %p48 = scmp.eq.s32.totalorder %s26, 1
      %p49 = por %p47, %p48
      %p51 = scmp.ne.s32.totalorder %s34, %s50
      %p52 = scmp.eq.s32.totalorder %s26, 0
      %p53 = por %p51, %p52
      %s55 = sadd.s32 %s54, 1
      %p58 = scmp.eq.s32.totalorder %s20, 1
      %p59 = scmp.ne.s32.totalorder %s54, %s56
      %p60 = scmp.eq.s32.totalorder %s20, 0
      %p61 = por %p59, %p60
      %p62 = scmp.ne.s32.totalorder %s54, %s56
      %p63 = scmp.eq.s32.totalorder %s25, 1
      %p64 = por %p62, %p63
      %p65 = scmp.ne.s32.totalorder %s56, %s57
      %p66 = scmp.eq.s32.totalorder %s25, 0
      %p67 = por %p65, %p66
      %p68 = scmp.ne.s32.totalorder %s56, %s57
      %p69 = scmp.eq.s32.totalorder %s26, 1
      %p70 = por %p68, %p69
      %p72 = scmp.ne.s32.totalorder %s57, %s71
      %p73 = scmp.eq.s32.totalorder %s26, 0
      %p74 = por %p72, %p73
      %s76 = sadd.s32 %s75, 1
      %p79 = scmp.eq.s32.totalorder %s20, 1
      %p80 = scmp.ne.s32.totalorder %s75, %s77
      %p81 = scmp.eq.s32.totalorder %s20, 0
      %p82 = por %p80, %p81
      %p83 = scmp.ne.s32.totalorder %s75, %s77
      %p84 = scmp.eq.s32.totalorder %s25, 1
      %p85 = por %p83, %p84
      %p86 = scmp.ne.s32.totalorder %s77, %s78
      %p87 = scmp.eq.s32.totalorder %s25, 0
      %p88 = por %p86, %p87
      %p89 = scmp.ne.s32.totalorder %s77, %s78
      %p90 = scmp.eq.s32.totalorder %s26, 1
      %p91 = por %p89, %p90
      %p93 = scmp.ne.s32.totalorder %s78, %s92
      %p94 = scmp.eq.s32.totalorder %s26, 0
      %p95 = por %p93, %p94
      %s97 = sadd.s32 %s96, 1
      %p100 = scmp.eq.s32.totalorder %s20, 1
      %p101 = scmp.ne.s32.totalorder %s96, %s98
      %p102 = scmp.eq.s32.totalorder %s20, 0
      %p103 = por %p101, %p102
      %p104 = scmp.ne.s32.totalorder %s96, %s98
      %p105 = scmp.eq.s32.totalorder %s25, 1
      %p106 = por %p104, %p105
      %p107 = scmp.ne.s32.totalorder %s98, %s99
      %p108 = scmp.eq.s32.totalorder %s25, 0
      %p109 = por %p107, %p108
      %p110 = scmp.ne.s32.totalorder %s98, %s99
      %p111 = scmp.eq.s32.totalorder %s26, 1
      %p112 = por %p110, %p111
      %p114 = scmp.ne.s32.totalorder %s99, %s113
      %p115 = scmp.eq.s32.totalorder %s26, 0
      %p116 = por %p114, %p115
      %s118 = sadd.s32 %s117, 1
      %p121 = scmp.eq.s32.totalorder %s20, 1
      %p122 = scmp.ne.s32.totalorder %s117, %s119
      %p123 = scmp.eq.s32.totalorder %s20, 0
      %p124 = por %p122, %p123
      %p125 = scmp.ne.s32.totalorder %s117, %s119
      %p126 = scmp.eq.s32.totalorder %s25, 1
      %p127 = por %p125, %p126
      %p128 = scmp.ne.s32.totalorder %s119, %s120
      %p129 = scmp.eq.s32.totalorder %s25, 0
      %p130 = por %p128, %p129
      %p131 = scmp.ne.s32.totalorder %s119, %s120
      %p132 = scmp.eq.s32.totalorder %s26, 1
      %p133 = por %p131, %p132
      %p135 = scmp.ne.s32.totalorder %s120, %s134
      %p136 = scmp.eq.s32.totalorder %s26, 0
      %p137 = por %p135, %p136
      %s139 = sadd.s32 %s138, 1
      %p142 = scmp.eq.s32.totalorder %s20, 1
      %p143 = scmp.ne.s32.totalorder %s138, %s140
      %p144 = scmp.eq.s32.totalorder %s20, 0
      %p145 = por %p143, %p144
      %p146 = scmp.ne.s32.totalorder %s138, %s140
      %p147 = scmp.eq.s32.totalorder %s25, 1
      %p148 = por %p146, %p147
      %p149 = scmp.ne.s32.totalorder %s140, %s141
      %p150 = scmp.eq.s32.totalorder %s25, 0
      %p151 = por %p149, %p150
      %p152 = scmp.ne.s32.totalorder %s140, %s141
      %p153 = scmp.eq.s32.totalorder %s26, 1
      %p154 = por %p152, %p153
      %p156 = scmp.ne.s32.totalorder %s141, %s155
      %p157 = scmp.eq.s32.totalorder %s26, 0
      %p158 = por %p156, %p157
      %s160 = sadd.s32 %s159, 1
      %p163 = scmp.eq.s32.totalorder %s20, 1
      %p164 = scmp.ne.s32.totalorder %s159, %s161
      %p165 = scmp.eq.s32.totalorder %s20, 0
      %p166 = por %p164, %p165
      %p167 = scmp.ne.s32.totalorder %s159, %s161
      %p168 = scmp.eq.s32.totalorder %s25, 1
      %p169 = por %p167, %p168
      %p170 = scmp.ne.s32.totalorder %s161, %s162
      %p171 = scmp.eq.s32.totalorder %s25, 0
      %p172 = por %p170, %p171
      %p173 = scmp.ne.s32.totalorder %s161, %s162
      %p174 = scmp.eq.s32.totalorder %s26, 1
      %p175 = por %p173, %p174
      %p177 = scmp.ne.s32.totalorder %s162, %s176
      %p178 = scmp.eq.s32.totalorder %s26, 0
      %p179 = por %p177, %p178
      %s180 = ssub.s32 %s20, %s27
      %p181 = scmp.eq.s32.totalorder %s180, 0
      %s183 = sadd.s32 %s182, 1
      %s184 = scalar_select %p181, %s182, %s183
      %p187 = pneg %p181
      %p188 = scmp.eq.s32.totalorder %s20, 1
      %p189 = por %p187, %p188
      %p190 = scmp.ne.s32.totalorder %s182, %s185
      %p191 = scmp.eq.s32.totalorder %s20, 0
      %p192 = por %p190, %p191
      %p193 = scmp.ne.s32.totalorder %s182, %s185
      %p194 = scmp.eq.s32.totalorder %s25, 1
      %p195 = por %p193, %p194
      %p196 = scmp.ne.s32.totalorder %s185, %s186
      %p197 = scmp.eq.s32.totalorder %s25, 0
      %p198 = por %p196, %p197
      %p199 = scmp.ne.s32.totalorder %s185, %s186
      %p200 = scmp.eq.s32.totalorder %s26, 1
      %p201 = por %p199, %p200
      %p203 = scmp.ne.s32.totalorder %s186, %s202
      %p204 = scmp.eq.s32.totalorder %s26, 0
      %p205 = por %p203, %p204
      %p206 = scmp.le.s32.totalorder 1, %s20
      %p207 = scmp.lt.s32.totalorder %s20, 3
      %p208 = pnand %p206, %p207
      %p209 = pneg %p208
      // Predicated region
      $region9: #{tpu_custom_call.1} parent=5 // pred_check
        _
      $region10: #{tpu_custom_call.1} parent=5 // pred_check_branch
        %211 = sbr.rel (%p208) target = $region12
      $region11: #{tpu_custom_call.1} parent=5 // pred_region
        %s212 = ssub.s32 %s20, 1
        // Predicated region
        $region13: #{tpu_custom_call.1} parent=11 // pred_check
          %p213 = pneg %p67
        $region14: #{tpu_custom_call.1} parent=11 // pred_check_branch
          %215 = sbr.rel (%p213) target = $region16
        $region15: #{tpu_custom_call.1} parent=11 // pred_region
          %s217 = ssub.s32 6144, 6144
          %218 = vsyncadd [#allocation6], %s217
          %s219 = sshll.u32 [#allocation5], 4
          %s220 = int_to_ptr.vmem [resolvable:$true] %s219
          %225 = dma.hbm_to_vmem [thread:$0]  %s1, 6144, %s220, [#allocation6], 128, 128, 8
        $region16: #{tpu_custom_call.1} parent=11 // pred_fallthru
          _
        // Predicated region
        $region17: #{tpu_custom_call.1} parent=11 // pred_check
          %p226 = pneg %p88
        $region18: #{tpu_custom_call.1} parent=11 // pred_check_branch
          %228 = sbr.rel (%p226) target = $region20
        $region19: #{tpu_custom_call.1} parent=11 // pred_region
          %s230 = ssub.s32 6144, 6144
          %231 = vsyncadd [#allocation6], %s230
          %s232 = sshll.u32 [#allocation7], 4
          %s233 = int_to_ptr.vmem [resolvable:$true] %s232
          %238 = dma.hbm_to_vmem [thread:$0]  %s2, 6144, %s233, [#allocation6], 128, 128, 8
        $region20: #{tpu_custom_call.1} parent=11 // pred_fallthru
          _
        // Predicated region
        $region21: #{tpu_custom_call.1} parent=11 // pred_check
          %p239 = pneg %p109
        $region22: #{tpu_custom_call.1} parent=11 // pred_check_branch
          %241 = sbr.rel (%p239) target = $region24
        $region23: #{tpu_custom_call.1} parent=11 // pred_region
          _
        $region24: #{tpu_custom_call.1} parent=11 // pred_fallthru
          _
        // Predicated region
        $region25: #{tpu_custom_call.1} parent=11 // pred_check
          %p242 = pneg %p130
        $region26: #{tpu_custom_call.1} parent=11 // pred_check_branch
          %244 = sbr.rel (%p242) target = $region28
        $region27: #{tpu_custom_call.1} parent=11 // pred_region
          _
        $region28: #{tpu_custom_call.1} parent=11 // pred_fallthru
          _
        // Predicated region
        $region29: #{tpu_custom_call.1} parent=11 // pred_check
          %p245 = pneg %p151
        $region30: #{tpu_custom_call.1} parent=11 // pred_check_branch
          %247 = sbr.rel (%p245) target = $region32
        $region31: #{tpu_custom_call.1} parent=11 // pred_region
          _
        $region32: #{tpu_custom_call.1} parent=11 // pred_fallthru
          _
        // Predicated region
        $region33: #{tpu_custom_call.1} parent=11 // pred_check
          %p248 = pneg %p172
        $region34: #{tpu_custom_call.1} parent=11 // pred_check_branch
          %250 = sbr.rel (%p248) target = $region36
        $region35: #{tpu_custom_call.1} parent=11 // pred_region
          _
        $region36: #{tpu_custom_call.1} parent=11 // pred_fallthru
          _
      $region12: #{tpu_custom_call.1} parent=5 // pred_fallthru
        _
      %p251 = scmp.lt.s32.totalorder %s20, 2
      // Predicated region
      $region37: #{tpu_custom_call.1} parent=5 // pred_check
        %p252 = pneg %p251
      $region38: #{tpu_custom_call.1} parent=5 // pred_check_branch
        %254 = sbr.rel (%p252) target = $region40
      $region39: #{tpu_custom_call.1} parent=5 // pred_region
        // Predicated region
        $region41: #{tpu_custom_call.1} parent=39 // pred_check
          %p255 = pneg %p40
        $region42: #{tpu_custom_call.1} parent=39 // pred_check_branch
          %257 = sbr.rel (%p255) target = $region44
        $region43: #{tpu_custom_call.1} parent=39 // pred_region
          %s258 = sand.u32 %s30, 1
          %s259 = scalar_lea.sflag [#allocation3], %s258
          %s260 = sand.u32 %s30, 1
          %s261 = smul.addr %s260, 16
          %s262 = scalar_lea.vmem [#allocation2], %s261
          %s264 = ssub.s32 256, 256
          %265 = vsyncadd %s259, %s264
          %s266 = smul.addr %s20, 2
          %s267 = smul.addr %s266, 128
          %s268 = scalar_lea.hbm %s0, %s267
          %s269 = sshll.u32 %s262, 4
          %s270 = int_to_ptr.vmem [resolvable:$true] %s269
          %275 = dma.hbm_to_vmem [thread:$0]  %s268, 256, %s270, %s259, 128, 128, 8
        $region44: #{tpu_custom_call.1} parent=39 // pred_fallthru
          _
      $region40: #{tpu_custom_call.1} parent=5 // pred_fallthru
        _
      %p276 = scmp.le.s32.totalorder 1, %s20
      %p277 = scmp.lt.s32.totalorder %s20, 3
      %p278 = pnand %p276, %p277
      %p279 = pneg %p278
      // Predicated region
      $region45: #{tpu_custom_call.1} parent=5 // pred_check
        _
      $region46: #{tpu_custom_call.1} parent=5 // pred_check_branch
        %281 = sbr.rel (%p278) target = $region48
      $region47: #{tpu_custom_call.1} parent=5 // pred_region
        %s282 = ssub.s32 %s20, 1
        %s283 = sand.u32 %s33, 1
        %s284 = scalar_lea.sflag [#allocation3], %s283
        %s285 = sand.u32 %s33, 1
        %s286 = smul.addr %s285, 16
        %s287 = scalar_lea.vmem [#allocation2], %s286
        // Predicated region
        $region49: #{tpu_custom_call.1} parent=47 // pred_check
          %p288 = pneg %p46
        $region50: #{tpu_custom_call.1} parent=47 // pred_check_branch
          %290 = sbr.rel (%p288) target = $region52
        $region51: #{tpu_custom_call.1} parent=47 // pred_region
          %291 = dma.done %s284, 256
        $region52: #{tpu_custom_call.1} parent=47 // pred_fallthru
          _
        // Predicated region
        $region53: #{tpu_custom_call.1} parent=47 // pred_check
          %p292 = pneg %p67
        $region54: #{tpu_custom_call.1} parent=47 // pred_check_branch
          %294 = sbr.rel (%p292) target = $region56
        $region55: #{tpu_custom_call.1} parent=47 // pred_region
          %295 = dma.done [#allocation6], 6144
        $region56: #{tpu_custom_call.1} parent=47 // pred_fallthru
          _
        // Predicated region
        $region57: #{tpu_custom_call.1} parent=47 // pred_check
          %p296 = pneg %p88
        $region58: #{tpu_custom_call.1} parent=47 // pred_check_branch
          %298 = sbr.rel (%p296) target = $region60
        $region59: #{tpu_custom_call.1} parent=47 // pred_region
          %299 = dma.done [#allocation6], 6144
        $region60: #{tpu_custom_call.1} parent=47 // pred_fallthru
          _
        %s300 = sand.u32 %s33, 1
        %s301 = scalar_lea.sflag [#allocation3], %s300
        %s302 = sand.u32 %s33, 1
        %s303 = smul.addr %s302, 16
        %s304 = scalar_lea.vmem [#allocation2], %s303
        %p305 = pneg %p46
        %p306 = pneg %p43
        %p307 = pneg %p67
        %p308 = pneg %p64
        %p309 = pneg %p88
        %p310 = pneg %p85
        %p311 = pneg %p109
        %p312 = pneg %p106
        %p313 = pneg %p130
        %p314 = pneg %p127
        %p315 = pneg %p151
        %p316 = pneg %p148
        %p317 = pneg %p172
        %p318 = pneg %p169
        %p319 = pneg %p198
        %p320 = pneg %p195
        %s321 = sand.u32 %s185, 1
        %s322 = scalar_lea.sflag [#allocation4], %s321
        %s323 = sand.u32 %s185, 1
        %s324 = smul.addr %s323, 16
        %s325 = scalar_lea.vmem [#allocation8], %s324
        %v326 = vld [vmem:[%s287] sm:$0xff]
        %v327 = vld [vmem:[%s287 + $0x8] sm:$0xff]
        %vm330 = vcmask 1040384
        %v331 = vrot.slane %v326, 7
        %v332 = vrot.slane %v327, 7
        %v333 = vsel %vm330, %v331, %v332
        %v336 = vsel %vm330, 0.0, %v331
        %vm337 = vcmask 1046528
        %v338 = vrot.slane %v326, 1
        %v339 = vrot.slane %v327, 1
        %v340 = vsel %vm337, %v338, %v339
        %v343 = vsel %vm337, %v339, 0.0
        %v344 = vld [vmem:[#allocation5] sm:$0xff]
        %v345 = vld [vmem:[#allocation5 + $0x8] sm:$0xff]
        %v346 = vld [vmem:[#allocation5 + $0x10] sm:$0xff]
        %v347 = vld [vmem:[#allocation5 + $0x18] sm:$0xff]
        %v348 = vld [vmem:[#allocation5 + $0x20] sm:$0xff]
        %v349 = vld [vmem:[#allocation5 + $0x28] sm:$0xff]
        %v350 = vld [vmem:[#allocation5 + $0x30] sm:$0xff]
        %v351 = vld [vmem:[#allocation5 + $0x38] sm:$0xff]
        %v352 = vld [vmem:[#allocation5 + $0x40] sm:$0xff]
        %v353 = vld [vmem:[#allocation5 + $0x48] sm:$0xff]
        %v354 = vld [vmem:[#allocation5 + $0x50] sm:$0xff]
        %v355 = vld [vmem:[#allocation5 + $0x58] sm:$0xff]
        %v356 = vld [vmem:[#allocation5 + $0x60] sm:$0xff]
        %v357 = vld [vmem:[#allocation5 + $0x68] sm:$0xff]
        %v358 = vld [vmem:[#allocation5 + $0x70] sm:$0xff]
        %v359 = vld [vmem:[#allocation5 + $0x78] sm:$0xff]
        %s360 = scalar_lea.vmem [#allocation5], 128
        %v361 = vld [vmem:[%s360] sm:$0xff]
        %v362 = vld [vmem:[%s360 + $0x8] sm:$0xff]
        %v363 = vld [vmem:[%s360 + $0x10] sm:$0xff]
        %v364 = vld [vmem:[%s360 + $0x18] sm:$0xff]
        %v365 = vld [vmem:[%s360 + $0x20] sm:$0xff]
        %v366 = vld [vmem:[%s360 + $0x28] sm:$0xff]
        %v367 = vld [vmem:[%s360 + $0x30] sm:$0xff]
        %v368 = vld [vmem:[%s360 + $0x38] sm:$0xff]
        %v369 = vld [vmem:[%s360 + $0x40] sm:$0xff]
        %v370 = vld [vmem:[%s360 + $0x48] sm:$0xff]
        %v371 = vld [vmem:[%s360 + $0x50] sm:$0xff]
        %v372 = vld [vmem:[%s360 + $0x58] sm:$0xff]
        %v373 = vld [vmem:[%s360 + $0x60] sm:$0xff]
        %v374 = vld [vmem:[%s360 + $0x68] sm:$0xff]
        %v375 = vld [vmem:[%s360 + $0x70] sm:$0xff]
        %v376 = vld [vmem:[%s360 + $0x78] sm:$0xff]
        %377 = vmatprep.subr.mxu0 0.0
        %378 = vmatpush1.msra.mxu0 %v361
        %379 = vmatprep.subr.mxu0 0.0
        %380 = vmatpush1.msra.mxu0 %v362
        %381 = vmatprep.subr.mxu0 0.0
        %382 = vmatpush1.msra.mxu0 %v363
        %383 = vmatprep.subr.mxu0 0.0
        %384 = vmatpush1.msra.mxu0 %v364
        %385 = vmatprep.subr.mxu0 0.0
        %386 = vmatpush1.msra.mxu0 %v365
        %387 = vmatprep.subr.mxu0 0.0
        %388 = vmatpush1.msra.mxu0 %v366
        %389 = vmatprep.subr.mxu0 0.0
        %390 = vmatpush1.msra.mxu0 %v367
        %391 = vmatprep.subr.mxu0 0.0
        %392 = vmatpush1.msra.mxu0 %v368
        %393 = vmatprep.subr.mxu0 0.0
        %394 = vmatpush1.msra.mxu0 %v369
        %395 = vmatprep.subr.mxu0 0.0
        %396 = vmatpush1.msra.mxu0 %v370
        %397 = vmatprep.subr.mxu0 0.0
        %398 = vmatpush1.msra.mxu0 %v371
        %399 = vmatprep.subr.mxu0 0.0
        %400 = vmatpush1.msra.mxu0 %v372
        %401 = vmatprep.subr.mxu0 0.0
        %402 = vmatpush1.msra.mxu0 %v373
        %403 = vmatprep.subr.mxu0 0.0
        %404 = vmatpush1.msra.mxu0 %v374
        %405 = vmatprep.subr.mxu0 0.0
        %406 = vmatpush1.msra.mxu0 %v375
        %407 = vmatprep.subr.mxu0 0.0
        %408 = vmatpush1.msra.mxu0 %v376
        %409 = vmatprep.subr.mxu0 0.0
        %410 = vmatpush1.msra.mxu0 0.0
        %411 = vmatprep.subr.mxu0 0.0
        %412 = vmatpush1.msra.mxu0 0.0
        %413 = vmatprep.subr.mxu0 0.0
        %414 = vmatpush1.msra.mxu0 0.0
        %415 = vmatprep.subr.mxu0 0.0
        %416 = vmatpush1.msra.mxu0 0.0
        %417 = vmatprep.subr.mxu0 0.0
        %418 = vmatpush1.msra.mxu0 0.0
        %419 = vmatprep.subr.mxu0 0.0
        %420 = vmatpush1.msra.mxu0 0.0
        %421 = vmatprep.subr.mxu0 0.0
        %422 = vmatpush1.msra.mxu0 0.0
        %423 = vmatprep.subr.mxu0 0.0
        %424 = vmatpush1.msra.mxu0 0.0
        %425 = vmatprep.subr.mxu0 0.0
        %426 = vmatpush1.msra.mxu0 0.0
        %427 = vmatprep.subr.mxu0 0.0
        %428 = vmatpush1.msra.mxu0 0.0
        %429 = vmatprep.subr.mxu0 0.0
        %430 = vmatpush1.msra.mxu0 0.0
        %431 = vmatprep.subr.mxu0 0.0
        %432 = vmatpush1.msra.mxu0 0.0
        %433 = vmatprep.subr.mxu0 0.0
        %434 = vmatpush1.msra.mxu0 0.0
        %435 = vmatprep.subr.mxu0 0.0
        %436 = vmatpush1.msra.mxu0 0.0
        %437 = vmatprep.subr.mxu0 0.0
        %438 = vmatpush1.msra.mxu0 0.0
        %439 = vmatprep.subr.mxu0 0.0
        %440 = vmatpush1.msra.mxu0 0.0
        %441 = vmatprep.mubr.f32.mxu0 0.0
        %442 = vmatmul.mubr.f32.gmra.mrb[0].mxu0 %v326
        %v443 = vpop.f32.mrb[0].mxu0
        %v444 = vadd.f32 0.0, %v443
        %v445 = vpop.f32.mrb[0].mxu0
        %446 = vmatprep.mubr.f32.mxu0 0.0
        %447 = vmatmul.mubr.f32.gmra.mrb[0].mxu0 %v327
        %v448 = vpop.f32.mrb[0].mxu0
        %v449 = vadd.f32 0.0, %v448
        %v450 = vpop.f32.mrb[0].mxu0
        %451 = vdwg.mxu0
        %452 = vmatprep.subr.mxu0 0.0
        %453 = vmatpush1.msra.mxu0 %v344
        %454 = vmatprep.subr.mxu0 0.0
        %455 = vmatpush1.msra.mxu0 %v345
        %456 = vmatprep.subr.mxu0 0.0
        %457 = vmatpush1.msra.mxu0 %v346
        %458 = vmatprep.subr.mxu0 0.0
        %459 = vmatpush1.msra.mxu0 %v347
        %460 = vmatprep.subr.mxu0 0.0
        %461 = vmatpush1.msra.mxu0 %v348
        %462 = vmatprep.subr.mxu0 0.0
        %463 = vmatpush1.msra.mxu0 %v349
        %464 = vmatprep.subr.mxu0 0.0
        %465 = vmatpush1.msra.mxu0 %v350
        %466 = vmatprep.subr.mxu0 0.0
        %467 = vmatpush1.msra.mxu0 %v351
        %468 = vmatprep.subr.mxu0 0.0
        %469 = vmatpush1.msra.mxu0 %v352
        %470 = vmatprep.subr.mxu0 0.0
        %471 = vmatpush1.msra.mxu0 %v353
        %472 = vmatprep.subr.mxu0 0.0
        %473 = vmatpush1.msra.mxu0 %v354
        %474 = vmatprep.subr.mxu0 0.0
        %475 = vmatpush1.msra.mxu0 %v355
        %476 = vmatprep.subr.mxu0 0.0
        %477 = vmatpush1.msra.mxu0 %v356
        %478 = vmatprep.subr.mxu0 0.0
        %479 = vmatpush1.msra.mxu0 %v357
        %480 = vmatprep.subr.mxu0 0.0
        %481 = vmatpush1.msra.mxu0 %v358
        %482 = vmatprep.subr.mxu0 0.0
        %483 = vmatpush1.msra.mxu0 %v359
        %484 = vmatprep.subr.mxu0 0.0
        %485 = vmatpush1.msra.mxu0 0.0
        %486 = vmatprep.subr.mxu0 0.0
        %487 = vmatpush1.msra.mxu0 0.0
        %488 = vmatprep.subr.mxu0 0.0
        %489 = vmatpush1.msra.mxu0 0.0
        %490 = vmatprep.subr.mxu0 0.0
        %491 = vmatpush1.msra.mxu0 0.0
        %492 = vmatprep.subr.mxu0 0.0
        %493 = vmatpush1.msra.mxu0 0.0
        %494 = vmatprep.subr.mxu0 0.0
        %495 = vmatpush1.msra.mxu0 0.0
        %496 = vmatprep.subr.mxu0 0.0
        %497 = vmatpush1.msra.mxu0 0.0
        %498 = vmatprep.subr.mxu0 0.0
        %499 = vmatpush1.msra.mxu0 0.0
        %500 = vmatprep.subr.mxu0 0.0
        %501 = vmatpush1.msra.mxu0 0.0
        %502 = vmatprep.subr.mxu0 0.0
        %503 = vmatpush1.msra.mxu0 0.0
        %504 = vmatprep.subr.mxu0 0.0
        %505 = vmatpush1.msra.mxu0 0.0
        %506 = vmatprep.subr.mxu0 0.0
        %507 = vmatpush1.msra.mxu0 0.0
        %508 = vmatprep.subr.mxu0 0.0
        %509 = vmatpush1.msra.mxu0 0.0
        %510 = vmatprep.subr.mxu0 0.0
        %511 = vmatpush1.msra.mxu0 0.0
        %512 = vmatprep.subr.mxu0 0.0
        %513 = vmatpush1.msra.mxu0 0.0
        %514 = vmatprep.subr.mxu0 0.0
        %515 = vmatpush1.msra.mxu0 0.0
        %516 = vmatprep.mubr.f32.mxu0 0.0
        %517 = vmatmul.mubr.f32.gmra.mrb[0].mxu0 %v336
        %v518 = vpop.f32.mrb[0].mxu0
        %v519 = vadd.f32 %v444, %v518
        %v520 = vpop.f32.mrb[0].mxu0
        %521 = vmatprep.mubr.f32.mxu0 0.0
        %522 = vmatmul.mubr.f32.gmra.mrb[0].mxu0 %v333
        %v523 = vpop.f32.mrb[0].mxu0
        %v524 = vadd.f32 %v449, %v523
        %v525 = vpop.f32.mrb[0].mxu0
        %526 = vdwg.mxu0
        %s527 = scalar_lea.vmem [#allocation5], 256
        %v528 = vld [vmem:[%s527] sm:$0xff]
        %v529 = vld [vmem:[%s527 + $0x8] sm:$0xff]
        %v530 = vld [vmem:[%s527 + $0x10] sm:$0xff]
        %v531 = vld [vmem:[%s527 + $0x18] sm:$0xff]
        %v532 = vld [vmem:[%s527 + $0x20] sm:$0xff]
        %v533 = vld [vmem:[%s527 + $0x28] sm:$0xff]
        %v534 = vld [vmem:[%s527 + $0x30] sm:$0xff]
        %v535 = vld [vmem:[%s527 + $0x38] sm:$0xff]
        %v536 = vld [vmem:[%s527 + $0x40] sm:$0xff]
        %v537 = vld [vmem:[%s527 + $0x48] sm:$0xff]
        %v538 = vld [vmem:[%s527 + $0x50] sm:$0xff]
        %v539 = vld [vmem:[%s527 + $0x58] sm:$0xff]
        %v540 = vld [vmem:[%s527 + $0x60] sm:$0xff]
        %v541 = vld [vmem:[%s527 + $0x68] sm:$0xff]
        %v542 = vld [vmem:[%s527 + $0x70] sm:$0xff]
        %v543 = vld [vmem:[%s527 + $0x78] sm:$0xff]
        %544 = vmatprep.subr.mxu0 0.0
        %545 = vmatpush1.msra.mxu0 %v528
        %546 = vmatprep.subr.mxu0 0.0
        %547 = vmatpush1.msra.mxu0 %v529
        %548 = vmatprep.subr.mxu0 0.0
        %549 = vmatpush1.msra.mxu0 %v530
        %550 = vmatprep.subr.mxu0 0.0
        %551 = vmatpush1.msra.mxu0 %v531
        %552 = vmatprep.subr.mxu0 0.0
        %553 = vmatpush1.msra.mxu0 %v532
        %554 = vmatprep.subr.mxu0 0.0
        %555 = vmatpush1.msra.mxu0 %v533
        %556 = vmatprep.subr.mxu0 0.0
        %557 = vmatpush1.msra.mxu0 %v534
        %558 = vmatprep.subr.mxu0 0.0
        %559 = vmatpush1.msra.mxu0 %v535
        %560 = vmatprep.subr.mxu0 0.0
        %561 = vmatpush1.msra.mxu0 %v536
        %562 = vmatprep.subr.mxu0 0.0
        %563 = vmatpush1.msra.mxu0 %v537
        %564 = vmatprep.subr.mxu0 0.0
        %565 = vmatpush1.msra.mxu0 %v538
        %566 = vmatprep.subr.mxu0 0.0
        %567 = vmatpush1.msra.mxu0 %v539
        %568 = vmatprep.subr.mxu0 0.0
        %569 = vmatpush1.msra.mxu0 %v540
        %570 = vmatprep.subr.mxu0 0.0
        %571 = vmatpush1.msra.mxu0 %v541
        %572 = vmatprep.subr.mxu0 0.0
        %573 = vmatpush1.msra.mxu0 %v542
        %574 = vmatprep.subr.mxu0 0.0
        %575 = vmatpush1.msra.mxu0 %v543
        %576 = vmatprep.subr.mxu0 0.0
        %577 = vmatpush1.msra.mxu0 0.0
        %578 = vmatprep.subr.mxu0 0.0
        %579 = vmatpush1.msra.mxu0 0.0
        %580 = vmatprep.subr.mxu0 0.0
        %581 = vmatpush1.msra.mxu0 0.0
        %582 = vmatprep.subr.mxu0 0.0
        %583 = vmatpush1.msra.mxu0 0.0
        %584 = vmatprep.subr.mxu0 0.0
        %585 = vmatpush1.msra.mxu0 0.0
        %586 = vmatprep.subr.mxu0 0.0
        %587 = vmatpush1.msra.mxu0 0.0
        %588 = vmatprep.subr.mxu0 0.0
        %589 = vmatpush1.msra.mxu0 0.0
        %590 = vmatprep.subr.mxu0 0.0
        %591 = vmatpush1.msra.mxu0 0.0
        %592 = vmatprep.subr.mxu0 0.0
        %593 = vmatpush1.msra.mxu0 0.0
        %594 = vmatprep.subr.mxu0 0.0
        %595 = vmatpush1.msra.mxu0 0.0
        %596 = vmatprep.subr.mxu0 0.0
        %597 = vmatpush1.msra.mxu0 0.0
        %598 = vmatprep.subr.mxu0 0.0
        %599 = vmatpush1.msra.mxu0 0.0
        %600 = vmatprep.subr.mxu0 0.0
        %601 = vmatpush1.msra.mxu0 0.0
        %602 = vmatprep.subr.mxu0 0.0
        %603 = vmatpush1.msra.mxu0 0.0
        %604 = vmatprep.subr.mxu0 0.0
        %605 = vmatpush1.msra.mxu0 0.0
        %606 = vmatprep.subr.mxu0 0.0
        %607 = vmatpush1.msra.mxu0 0.0
        %608 = vmatprep.mubr.f32.mxu0 0.0
        %609 = vmatmul.mubr.f32.gmra.mrb[0].mxu0 %v340
        %v610 = vpop.f32.mrb[0].mxu0
        %v611 = vadd.f32 0.0, %v610
        %v612 = vpop.f32.mrb[0].mxu0
        %613 = vmatprep.mubr.f32.mxu0 0.0
        %614 = vmatmul.mubr.f32.gmra.mrb[0].mxu0 %v343
        %v615 = vpop.f32.mrb[0].mxu0
        %v616 = vadd.f32 0.0, %v615
        %v617 = vpop.f32.mrb[0].mxu0
        %618 = vdwg.mxu0
        %v619 = vadd.f32 %v519, %v611
        %v620 = vadd.f32 %v524, %v616
        %v621 = vmax.f32 %v619, 0.0
        %v622 = vmax.f32 %v620, 0.0
        %v623 = vld [vmem:[%s3] sm:$0x1]
        %v625 = vlaneseq
        %v626 = vshrl.u32 %v625, 7
        %v627 = vsub.s32 0, %v626
        %v628 = vrot.slane %v623, %v627
        %v630 = vmul.f32 %v621, %v628
        %v631 = vmul.f32 %v622, %v628
        %v632 = vld [vmem:[%s4] sm:$0x1]
        %v634 = vlaneseq
        %v635 = vshrl.u32 %v634, 7
        %v636 = vsub.s32 0, %v635
        %v637 = vrot.slane %v632, %v636
        %v639 = vadd.f32 %v630, %v637
        %v640 = vadd.f32 %v631, %v637
        %v643 = vrot.slane %v639, 7
        %v644 = vrot.slane %v640, 7
        %v645 = vsel %vm330, %v643, %v644
        %v648 = vsel %vm330, 0.0, %v643
        %v649 = vrot.slane %v639, 1
        %v650 = vrot.slane %v640, 1
        %v651 = vsel %vm337, %v649, %v650
        %v654 = vsel %vm337, %v650, 0.0
        %v655 = vld [vmem:[#allocation7] sm:$0xff]
        %v656 = vld [vmem:[#allocation7 + $0x8] sm:$0xff]
        %v657 = vld [vmem:[#allocation7 + $0x10] sm:$0xff]
        %v658 = vld [vmem:[#allocation7 + $0x18] sm:$0xff]
        %v659 = vld [vmem:[#allocation7 + $0x20] sm:$0xff]
        %v660 = vld [vmem:[#allocation7 + $0x28] sm:$0xff]
        %v661 = vld [vmem:[#allocation7 + $0x30] sm:$0xff]
        %v662 = vld [vmem:[#allocation7 + $0x38] sm:$0xff]
        %v663 = vld [vmem:[#allocation7 + $0x40] sm:$0xff]
        %v664 = vld [vmem:[#allocation7 + $0x48] sm:$0xff]
        %v665 = vld [vmem:[#allocation7 + $0x50] sm:$0xff]
        %v666 = vld [vmem:[#allocation7 + $0x58] sm:$0xff]
        %v667 = vld [vmem:[#allocation7 + $0x60] sm:$0xff]
        %v668 = vld [vmem:[#allocation7 + $0x68] sm:$0xff]
        %v669 = vld [vmem:[#allocation7 + $0x70] sm:$0xff]
        %v670 = vld [vmem:[#allocation7 + $0x78] sm:$0xff]
        %s671 = scalar_lea.vmem [#allocation7], 128
        %v672 = vld [vmem:[%s671] sm:$0xff]
        %v673 = vld [vmem:[%s671 + $0x8] sm:$0xff]
        %v674 = vld [vmem:[%s671 + $0x10] sm:$0xff]
        %v675 = vld [vmem:[%s671 + $0x18] sm:$0xff]
        %v676 = vld [vmem:[%s671 + $0x20] sm:$0xff]
        %v677 = vld [vmem:[%s671 + $0x28] sm:$0xff]
        %v678 = vld [vmem:[%s671 + $0x30] sm:$0xff]
        %v679 = vld [vmem:[%s671 + $0x38] sm:$0xff]
        %v680 = vld [vmem:[%s671 + $0x40] sm:$0xff]
        %v681 = vld [vmem:[%s671 + $0x48] sm:$0xff]
        %v682 = vld [vmem:[%s671 + $0x50] sm:$0xff]
        %v683 = vld [vmem:[%s671 + $0x58] sm:$0xff]
        %v684 = vld [vmem:[%s671 + $0x60] sm:$0xff]
        %v685 = vld [vmem:[%s671 + $0x68] sm:$0xff]
        %v686 = vld [vmem:[%s671 + $0x70] sm:$0xff]
        %v687 = vld [vmem:[%s671 + $0x78] sm:$0xff]
        %688 = vmatprep.subr.mxu0 0.0
        %689 = vmatpush1.msra.mxu0 %v672
        %690 = vmatprep.subr.mxu0 0.0
        %691 = vmatpush1.msra.mxu0 %v673
        %692 = vmatprep.subr.mxu0 0.0
        %693 = vmatpush1.msra.mxu0 %v674
        %694 = vmatprep.subr.mxu0 0.0
        %695 = vmatpush1.msra.mxu0 %v675
        %696 = vmatprep.subr.mxu0 0.0
        %697 = vmatpush1.msra.mxu0 %v676
        %698 = vmatprep.subr.mxu0 0.0
        %699 = vmatpush1.msra.mxu0 %v677
        %700 = vmatprep.subr.mxu0 0.0
        %701 = vmatpush1.msra.mxu0 %v678
        %702 = vmatprep.subr.mxu0 0.0
        %703 = vmatpush1.msra.mxu0 %v679
        %704 = vmatprep.subr.mxu0 0.0
        %705 = vmatpush1.msra.mxu0 %v680
        %706 = vmatprep.subr.mxu0 0.0
        %707 = vmatpush1.msra.mxu0 %v681
        %708 = vmatprep.subr.mxu0 0.0
        %709 = vmatpush1.msra.mxu0 %v682
        %710 = vmatprep.subr.mxu0 0.0
        %711 = vmatpush1.msra.mxu0 %v683
        %712 = vmatprep.subr.mxu0 0.0
        %713 = vmatpush1.msra.mxu0 %v684
        %714 = vmatprep.subr.mxu0 0.0
        %715 = vmatpush1.msra.mxu0 %v685
        %716 = vmatprep.subr.mxu0 0.0
        %717 = vmatpush1.msra.mxu0 %v686
        %718 = vmatprep.subr.mxu0 0.0
        %719 = vmatpush1.msra.mxu0 %v687
        %720 = vmatprep.subr.mxu0 0.0
        %721 = vmatpush1.msra.mxu0 0.0
        %722 = vmatprep.subr.mxu0 0.0
        %723 = vmatpush1.msra.mxu0 0.0
        %724 = vmatprep.subr.mxu0 0.0
        %725 = vmatpush1.msra.mxu0 0.0
        %726 = vmatprep.subr.mxu0 0.0
        %727 = vmatpush1.msra.mxu0 0.0
        %728 = vmatprep.subr.mxu0 0.0
        %729 = vmatpush1.msra.mxu0 0.0
        %730 = vmatprep.subr.mxu0 0.0
        %731 = vmatpush1.msra.mxu0 0.0
        %732 = vmatprep.subr.mxu0 0.0
        %733 = vmatpush1.msra.mxu0 0.0
        %734 = vmatprep.subr.mxu0 0.0
        %735 = vmatpush1.msra.mxu0 0.0
        %736 = vmatprep.subr.mxu0 0.0
        %737 = vmatpush1.msra.mxu0 0.0
        %738 = vmatprep.subr.mxu0 0.0
        %739 = vmatpush1.msra.mxu0 0.0
        %740 = vmatprep.subr.mxu0 0.0
        %741 = vmatpush1.msra.mxu0 0.0
        %742 = vmatprep.subr.mxu0 0.0
        %743 = vmatpush1.msra.mxu0 0.0
        %744 = vmatprep.subr.mxu0 0.0
        %745 = vmatpush1.msra.mxu0 0.0
        %746 = vmatprep.subr.mxu0 0.0
        %747 = vmatpush1.msra.mxu0 0.0
        %748 = vmatprep.subr.mxu0 0.0
        %749 = vmatpush1.msra.mxu0 0.0
        %750 = vmatprep.subr.mxu0 0.0
        %751 = vmatpush1.msra.mxu0 0.0
        %752 = vmatprep.mubr.f32.mxu0 0.0
        %753 = vmatmul.mubr.f32.gmra.mrb[0].mxu0 %v639
        %v754 = vpop.f32.mrb[0].mxu0
        %v755 = vadd.f32 0.0, %v754
        %v756 = vpop.f32.mrb[0].mxu0
        %757 = vmatprep.mubr.f32.mxu0 0.0
        %758 = vmatmul.mubr.f32.gmra.mrb[0].mxu0 %v640
        %v759 = vpop.f32.mrb[0].mxu0
        %v760 = vadd.f32 0.0, %v759
        %v761 = vpop.f32.mrb[0].mxu0
        %762 = vdwg.mxu0
        %763 = vmatprep.subr.mxu0 0.0
        %764 = vmatpush1.msra.mxu0 %v655
        %765 = vmatprep.subr.mxu0 0.0
        %766 = vmatpush1.msra.mxu0 %v656
        %767 = vmatprep.subr.mxu0 0.0
        %768 = vmatpush1.msra.mxu0 %v657
        %769 = vmatprep.subr.mxu0 0.0
        %770 = vmatpush1.msra.mxu0 %v658
        %771 = vmatprep.subr.mxu0 0.0
        %772 = vmatpush1.msra.mxu0 %v659
        %773 = vmatprep.subr.mxu0 0.0
        %774 = vmatpush1.msra.mxu0 %v660
        %775 = vmatprep.subr.mxu0 0.0
        %776 = vmatpush1.msra.mxu0 %v661
        %777 = vmatprep.subr.mxu0 0.0
        %778 = vmatpush1.msra.mxu0 %v662
        %779 = vmatprep.subr.mxu0 0.0
        %780 = vmatpush1.msra.mxu0 %v663
        %781 = vmatprep.subr.mxu0 0.0
        %782 = vmatpush1.msra.mxu0 %v664
        %783 = vmatprep.subr.mxu0 0.0
        %784 = vmatpush1.msra.mxu0 %v665
        %785 = vmatprep.subr.mxu0 0.0
        %786 = vmatpush1.msra.mxu0 %v666
        %787 = vmatprep.subr.mxu0 0.0
        %788 = vmatpush1.msra.mxu0 %v667
        %789 = vmatprep.subr.mxu0 0.0
        %790 = vmatpush1.msra.mxu0 %v668
        %791 = vmatprep.subr.mxu0 0.0
        %792 = vmatpush1.msra.mxu0 %v669
        %793 = vmatprep.subr.mxu0 0.0
        %794 = vmatpush1.msra.mxu0 %v670
        %795 = vmatprep.subr.mxu0 0.0
        %796 = vmatpush1.msra.mxu0 0.0
        %797 = vmatprep.subr.mxu0 0.0
        %798 = vmatpush1.msra.mxu0 0.0
        %799 = vmatprep.subr.mxu0 0.0
        %800 = vmatpush1.msra.mxu0 0.0
        %801 = vmatprep.subr.mxu0 0.0
        %802 = vmatpush1.msra.mxu0 0.0
        %803 = vmatprep.subr.mxu0 0.0
        %804 = vmatpush1.msra.mxu0 0.0
        %805 = vmatprep.subr.mxu0 0.0
        %806 = vmatpush1.msra.mxu0 0.0
        %807 = vmatprep.subr.mxu0 0.0
        %808 = vmatpush1.msra.mxu0 0.0
        %809 = vmatprep.subr.mxu0 0.0
        %810 = vmatpush1.msra.mxu0 0.0
        %811 = vmatprep.subr.mxu0 0.0
        %812 = vmatpush1.msra.mxu0 0.0
        %813 = vmatprep.subr.mxu0 0.0
        %814 = vmatpush1.msra.mxu0 0.0
        %815 = vmatprep.subr.mxu0 0.0
        %816 = vmatpush1.msra.mxu0 0.0
        %817 = vmatprep.subr.mxu0 0.0
        %818 = vmatpush1.msra.mxu0 0.0
        %819 = vmatprep.subr.mxu0 0.0
        %820 = vmatpush1.msra.mxu0 0.0
        %821 = vmatprep.subr.mxu0 0.0
        %822 = vmatpush1.msra.mxu0 0.0
        %823 = vmatprep.subr.mxu0 0.0
        %824 = vmatpush1.msra.mxu0 0.0
        %825 = vmatprep.subr.mxu0 0.0
        %826 = vmatpush1.msra.mxu0 0.0
        %827 = vmatprep.mubr.f32.mxu0 0.0
        %828 = vmatmul.mubr.f32.gmra.mrb[0].mxu0 %v648
        %v829 = vpop.f32.mrb[0].mxu0
        %v830 = vadd.f32 %v755, %v829
        %v831 = vpop.f32.mrb[0].mxu0
        %832 = vmatprep.mubr.f32.mxu0 0.0
        %833 = vmatmul.mubr.f32.gmra.mrb[0].mxu0 %v645
        %v834 = vpop.f32.mrb[0].mxu0
        %v835 = vadd.f32 %v760, %v834
        %v836 = vpop.f32.mrb[0].mxu0
        %837 = vdwg.mxu0
        %s838 = scalar_lea.vmem [#allocation7], 256
        %v839 = vld [vmem:[%s838] sm:$0xff]
        %v840 = vld [vmem:[%s838 + $0x8] sm:$0xff]
        %v841 = vld [vmem:[%s838 + $0x10] sm:$0xff]
        %v842 = vld [vmem:[%s838 + $0x18] sm:$0xff]
        %v843 = vld [vmem:[%s838 + $0x20] sm:$0xff]
        %v844 = vld [vmem:[%s838 + $0x28] sm:$0xff]
        %v845 = vld [vmem:[%s838 + $0x30] sm:$0xff]
        %v846 = vld [vmem:[%s838 + $0x38] sm:$0xff]
        %v847 = vld [vmem:[%s838 + $0x40] sm:$0xff]
        %v848 = vld [vmem:[%s838 + $0x48] sm:$0xff]
        %v849 = vld [vmem:[%s838 + $0x50] sm:$0xff]
        %v850 = vld [vmem:[%s838 + $0x58] sm:$0xff]
        %v851 = vld [vmem:[%s838 + $0x60] sm:$0xff]
        %v852 = vld [vmem:[%s838 + $0x68] sm:$0xff]
        %v853 = vld [vmem:[%s838 + $0x70] sm:$0xff]
        %v854 = vld [vmem:[%s838 + $0x78] sm:$0xff]
        %855 = vmatprep.subr.mxu0 0.0
        %856 = vmatpush1.msra.mxu0 %v839
        %857 = vmatprep.subr.mxu0 0.0
        %858 = vmatpush1.msra.mxu0 %v840
        %859 = vmatprep.subr.mxu0 0.0
        %860 = vmatpush1.msra.mxu0 %v841
        %861 = vmatprep.subr.mxu0 0.0
        %862 = vmatpush1.msra.mxu0 %v842
        %863 = vmatprep.subr.mxu0 0.0
        %864 = vmatpush1.msra.mxu0 %v843
        %865 = vmatprep.subr.mxu0 0.0
        %866 = vmatpush1.msra.mxu0 %v844
        %867 = vmatprep.subr.mxu0 0.0
        %868 = vmatpush1.msra.mxu0 %v845
        %869 = vmatprep.subr.mxu0 0.0
        %870 = vmatpush1.msra.mxu0 %v846
        %871 = vmatprep.subr.mxu0 0.0
        %872 = vmatpush1.msra.mxu0 %v847
        %873 = vmatprep.subr.mxu0 0.0
        %874 = vmatpush1.msra.mxu0 %v848
        %875 = vmatprep.subr.mxu0 0.0
        %876 = vmatpush1.msra.mxu0 %v849
        %877 = vmatprep.subr.mxu0 0.0
        %878 = vmatpush1.msra.mxu0 %v850
        %879 = vmatprep.subr.mxu0 0.0
        %880 = vmatpush1.msra.mxu0 %v851
        %881 = vmatprep.subr.mxu0 0.0
        %882 = vmatpush1.msra.mxu0 %v852
        %883 = vmatprep.subr.mxu0 0.0
        %884 = vmatpush1.msra.mxu0 %v853
        %885 = vmatprep.subr.mxu0 0.0
        %886 = vmatpush1.msra.mxu0 %v854
        %887 = vmatprep.subr.mxu0 0.0
        %888 = vmatpush1.msra.mxu0 0.0
        %889 = vmatprep.subr.mxu0 0.0
        %890 = vmatpush1.msra.mxu0 0.0
        %891 = vmatprep.subr.mxu0 0.0
        %892 = vmatpush1.msra.mxu0 0.0
        %893 = vmatprep.subr.mxu0 0.0
        %894 = vmatpush1.msra.mxu0 0.0
        %895 = vmatprep.subr.mxu0 0.0
        %896 = vmatpush1.msra.mxu0 0.0
        %897 = vmatprep.subr.mxu0 0.0
        %898 = vmatpush1.msra.mxu0 0.0
        %899 = vmatprep.subr.mxu0 0.0
        %900 = vmatpush1.msra.mxu0 0.0
        %901 = vmatprep.subr.mxu0 0.0
        %902 = vmatpush1.msra.mxu0 0.0
        %903 = vmatprep.subr.mxu0 0.0
        %904 = vmatpush1.msra.mxu0 0.0
        %905 = vmatprep.subr.mxu0 0.0
        %906 = vmatpush1.msra.mxu0 0.0
        %907 = vmatprep.subr.mxu0 0.0
        %908 = vmatpush1.msra.mxu0 0.0
        %909 = vmatprep.subr.mxu0 0.0
        %910 = vmatpush1.msra.mxu0 0.0
        %911 = vmatprep.subr.mxu0 0.0
        %912 = vmatpush1.msra.mxu0 0.0
        %913 = vmatprep.subr.mxu0 0.0
        %914 = vmatpush1.msra.mxu0 0.0
        %915 = vmatprep.subr.mxu0 0.0
        %916 = vmatpush1.msra.mxu0 0.0
        %917 = vmatprep.subr.mxu0 0.0
        %918 = vmatpush1.msra.mxu0 0.0
        %919 = vmatprep.mubr.f32.mxu0 0.0
        %920 = vmatmul.mubr.f32.gmra.mrb[0].mxu0 %v651
        %v921 = vpop.f32.mrb[0].mxu0
        %v922 = vadd.f32 0.0, %v921
        %v923 = vpop.f32.mrb[0].mxu0
        %924 = vmatprep.mubr.f32.mxu0 0.0
        %925 = vmatmul.mubr.f32.gmra.mrb[0].mxu0 %v654
        %v926 = vpop.f32.mrb[0].mxu0
        %v927 = vadd.f32 0.0, %v926
        %v928 = vpop.f32.mrb[0].mxu0
        %929 = vdwg.mxu0
        %v930 = vadd.f32 %v830, %v922
        %v931 = vadd.f32 %v835, %v927
        %v932 = vld [vmem:[%s5] sm:$0x1]
        %v934 = vlaneseq
        %v935 = vshrl.u32 %v934, 7
        %v936 = vsub.s32 0, %v935
        %v937 = vrot.slane %v932, %v936
        %v939 = vmul.f32 %v930, %v937
        %v940 = vmul.f32 %v931, %v937
        %v941 = vld [vmem:[%s6] sm:$0x1]
        %v943 = vlaneseq
        %v944 = vshrl.u32 %v943, 7
        %v945 = vsub.s32 0, %v944
        %v946 = vrot.slane %v941, %v945
        %v948 = vadd.f32 %v939, %v946
        %v949 = vadd.f32 %v940, %v946
        %v950 = vadd.f32 %v948, %v326
        %v951 = vadd.f32 %v949, %v327
        %v952 = vmax.f32 %v950, 0.0
        %v953 = vmax.f32 %v951, 0.0
        %954 = vst [vmem:[%s325] sm:$0xff] %v952
        %955 = vst [vmem:[%s325 + $0x8] sm:$0xff] %v953
        %s956 = sand.u32 %s185, 1
        %s957 = scalar_lea.sflag [#allocation4], %s956
        %s958 = sand.u32 %s185, 1
        %s959 = smul.addr %s958, 16
        %s960 = scalar_lea.vmem [#allocation8], %s959
        // Predicated region
        $region61: #{tpu_custom_call.1} parent=47 // pred_check
          %p961 = pneg %p195
        $region62: #{tpu_custom_call.1} parent=47 // pred_check_branch
          %963 = sbr.rel (%p961) target = $region64
        $region63: #{tpu_custom_call.1} parent=47 // pred_region
          %s965 = ssub.s32 256, 256
          %966 = vsyncadd %s957, %s965
          %s967 = smul.addr %s25, 2
          %s968 = smul.addr %s967, 128
          %s969 = scalar_lea.hbm %s7, %s968
          %s970 = sshll.u32 %s960, 4
          %s971 = int_to_ptr.vmem [resolvable:$true] %s970
          %976 = dma.vmem_to_hbm [thread:$0]  %s971, 256, %s969, %s957, 128, 128, 8
        $region64: #{tpu_custom_call.1} parent=47 // pred_fallthru
          _
      $region48: #{tpu_custom_call.1} parent=5 // pred_fallthru
        _
      %p977 = scmp.le.s32.totalorder 2, %s20
      // Predicated region
      $region65: #{tpu_custom_call.1} parent=5 // pred_check
        %p978 = pneg %p977
      $region66: #{tpu_custom_call.1} parent=5 // pred_check_branch
        %980 = sbr.rel (%p978) target = $region68
      $region67: #{tpu_custom_call.1} parent=5 // pred_region
        %s981 = ssub.s32 %s20, 2
        // Predicated region
        $region69: #{tpu_custom_call.1} parent=67 // pred_check
          %p982 = pneg %p201
        $region70: #{tpu_custom_call.1} parent=67 // pred_check_branch
          %984 = sbr.rel (%p982) target = $region72
        $region71: #{tpu_custom_call.1} parent=67 // pred_region
          %s985 = sand.u32 %s186, 1
          %s986 = scalar_lea.sflag [#allocation4], %s985
          %s987 = sand.u32 %s186, 1
          %s988 = smul.addr %s987, 16
          %s989 = scalar_lea.vmem [#allocation8], %s988
          %990 = dma.done %s986, 256
        $region72: #{tpu_custom_call.1} parent=67 // pred_fallthru
          _
      $region68: #{tpu_custom_call.1} parent=5 // pred_fallthru
        _
    $region6: #{tpu_custom_call.1} parent=1 // loop_footer
      %s24 = sadd.s32 1, %s20
    $region7: #{tpu_custom_call.1} parent=1 // loop_footer_branch
      %19 = sbr.rel target = $region3
    $region8: #{tpu_custom_call.1} parent=1 // loop_exit
      _
    %991 = vsyncpa [#allocation3], 1
    %s992 = scalar_lea.sflag [#allocation3], 1
    %993 = vsyncpa %s992, 1
    %994 = vsyncpa [#allocation6], 1
    %995 = vsyncpa [#allocation4], 1
    %s996 = scalar_lea.sflag [#allocation4], 1
    %997 = vsyncpa %s996, 1

</llo_original>
